<compile_context>
chip_gen: v7x
topology: tpu7x:2x2x1
jax: 0.10.0
libtpu: 0.0.40
codegen_flags: <defaults>
</compile_context>

<pallas_src>
import functools

import jax
import jax.numpy as jnp
from jax.experimental import pallas as pl
from jax.experimental.pallas import tpu as pltpu


def _round_up(a, b):
    return ((a + b - 1) // b) * b


def _conv_stats_kernel(x_ref, w_ref, y_ref, stats_ref):
    # Conv-as-GEMM on the MXU: bf16 operands, f32 accumulation.
    y = jnp.dot(x_ref[...], w_ref[...], preferred_element_type=jnp.float32)
    y_ref[...] = y

    # Per-tile partial BatchNorm statistics over the rows of this tile.
    s = jnp.sum(y, axis=0, keepdims=True)        # (1, Cp)  sum
    ss = jnp.sum(y * y, axis=0, keepdims=True)   # (1, Cp)  sum of squares
    row = jax.lax.broadcasted_iota(jnp.int32, (8, y.shape[1]), 0)
    stats = jnp.where(row == 0, s, jnp.where(row == 1, ss, 0.0))
    stats_ref[...] = stats[None, :, :]           # (1, 8, Cp) block


def _bn_act_kernel(y_ref, scale_ref, bias_ref, o_ref, *, negative_slope):
    # Fused normalize (y*scale + bias) + LeakyReLU, all f32 on the VPU.
    t = y_ref[...] * scale_ref[...] + bias_ref[...]
    o_ref[...] = jnp.where(t >= 0.0, t, negative_slope * t).astype(o_ref.dtype)


def cnn_block_forward(x, weight, *, negative_slope=0.2, eps=1e-5):
    """Forward pass of CNNBlock (stride=2).

    x: (N, C_in, D, H, W) float32.  weight: (C_out, C_in, 4, 4, 4) float32.
    """
    N, Cin, D, H, W = x.shape
    Cout = weight.shape[0]
    Dout, Hout, Wout = D // 2, H // 2, W // 2

    # ---- im2col on channels-last input, built directly in bf16 ------------
    xcl = jnp.transpose(x, (0, 2, 3, 4, 1)).astype(jnp.bfloat16)   # (N,D,H,W,C)
    xp = jnp.pad(xcl, ((0, 0), (1, 1), (1, 1), (1, 1), (0, 0)), mode="reflect")
    patches = []
    for kd in range(4):
        for kh in range(4):
            for kw in range(4):
                patches.append(
                    xp[:, kd:kd + 2 * Dout:2, kh:kh + 2 * Hout:2,
                       kw:kw + 2 * Wout:2, :])
    # (N, Dout, Hout, Wout, 64, Cin): K ordered as (kd, kh, kw, Cin)
    p = jnp.stack(patches, axis=4)

    M = N * Dout * Hout * Wout
    K = Cin * 64
    x_col = p.reshape(M, K)

    # Weight to (kd, kh, kw, Cin, Cout) to match K ordering; pad Cout -> 128.
    Cp = _round_up(max(Cout, 128), 128)
    w_col = jnp.transpose(weight, (2, 3, 4, 1, 0)).reshape(K, Cout)
    w_col = jnp.pad(w_col, ((0, 0), (0, Cp - Cout))).astype(jnp.bfloat16)

    # Tile M (rows); pad with zero rows so the grid divides evenly.  Zero rows
    # contribute nothing to the BN partial sums.
    TM = min(512, _round_up(M, 8))
    M_pad = _round_up(M, TM)
    if M_pad > M:
        x_col = jnp.pad(x_col, ((0, M_pad - M), (0, 0)))
    num_tiles = M_pad // TM

    # ---- Pass 1: tiled GEMM + per-tile BN partials -------------------------
    cost1 = pl.CostEstimate(
        flops=2 * M_pad * K * Cp,
        transcendentals=0,
        bytes_accessed=(M_pad * K * 2 + K * Cp * 2
                        + M_pad * Cp * 4 + num_tiles * 8 * Cp * 4))
    y, stats = pl.pallas_call(
        _conv_stats_kernel,
        out_shape=(jax.ShapeDtypeStruct((M_pad, Cp), jnp.float32),
                   jax.ShapeDtypeStruct((num_tiles, 8, Cp), jnp.float32)),
        grid=(num_tiles,),
        in_specs=[pl.BlockSpec((TM, K), lambda i: (i, 0)),
                  pl.BlockSpec((K, Cp), lambda i: (0, 0))],
        out_specs=(pl.BlockSpec((TM, Cp), lambda i: (i, 0)),
                   pl.BlockSpec((1, 8, Cp), lambda i: (i, 0, 0))),
        compiler_params=pltpu.CompilerParams(
            dimension_semantics=("parallel",)),
        cost_estimate=cost1,
    )(x_col, w_col)

    # ---- Reduce tiny partials in plain JAX: global batch statistics --------
    total = jnp.sum(stats[:, 0, :], axis=0)        # (Cp,)
    total_sq = jnp.sum(stats[:, 1, :], axis=0)     # (Cp,)
    mean = total / M                               # divide by TRUE M
    var = total_sq / M - mean * mean               # biased variance (train BN)
    inv_std = jax.lax.rsqrt(var + eps)             # gamma=1, beta=0
    scale = inv_std.reshape(1, Cp)
    bias = (-mean * inv_std).reshape(1, Cp)

    # ---- Pass 2: tiled normalize + LeakyReLU --------------------------------
    cost2 = pl.CostEstimate(
        flops=4 * M_pad * Cp,
        transcendentals=0,
        bytes_accessed=2 * M_pad * Cp * 4 + 2 * Cp * 4)
    out_flat = pl.pallas_call(
        functools.partial(_bn_act_kernel, negative_slope=negative_slope),
        out_shape=jax.ShapeDtypeStruct((M_pad, Cp), x.dtype),
        grid=(num_tiles,),
        in_specs=[pl.BlockSpec((TM, Cp), lambda i: (i, 0)),
                  pl.BlockSpec((1, Cp), lambda i: (0, 0)),
                  pl.BlockSpec((1, Cp), lambda i: (0, 0))],
        out_specs=pl.BlockSpec((TM, Cp), lambda i: (i, 0)),
        compiler_params=pltpu.CompilerParams(
            dimension_semantics=("parallel",)),
        cost_estimate=cost2,
    )(y, scale, bias)

    # Slice off M / channel padding and go back to NCDHW.
    out = out_flat[:M, :Cout].reshape(N, Dout, Hout, Wout, Cout)
    return jnp.transpose(out, (0, 4, 1, 2, 3))


if __name__ == "__main__":
    key = jax.random.PRNGKey(0)
    kx, kw = jax.random.split(key)

    N, Cin, Cout = 2, 4, 8
    D = H = W = 16

    x = jax.random.normal(kx, (N, Cin, D, H, W), dtype=jnp.float32)

    # Deterministic Kaiming-normal init, mode='fan_in', nonlinearity='leaky_relu'
    # (default a=0 -> gain sqrt(2)): std = sqrt(2 / fan_in), fan_in = Cin*4*4*4.
    fan_in = Cin * 4 * 4 * 4
    std = (2.0 / fan_in) ** 0.5
    weight = std * jax.random.normal(kw, (Cout, Cin, 4, 4, 4), dtype=jnp.float32)

    out = cnn_block_forward(x, weight)
    out = jax.block_until_ready(out)
    assert out.shape == (N, Cout, D // 2, H // 2, W // 2)
    print("KERNEL_OK")
</pallas_src>

<mosaic_0001>
module attributes {stable_mosaic.version = 11 : i64} {
  func.func @_conv_stats_kernel(%arg0: i32, %arg1: memref<512x256xbf16, #tpu.memory_space<vmem>>, %arg2: memref<256x128xbf16, #tpu.memory_space<vmem>>, %arg3: memref<512x128xf32, #tpu.memory_space<vmem>>, %arg4: memref<1x8x128xf32, #tpu.memory_space<vmem>>) attributes {dimension_semantics = [#tpu.dimension_semantics<parallel>], iteration_bounds = array<i64: 2>, scalar_prefetch = 0 : i64, scratch_operands = 0 : i64, tpu.core_type = #tpu.core_type<tc>, window_params = [{transform_indices = @transform_0, window_bounds = array<i64: 512, 256>}, {pipeline_mode = #tpu.pipeline_mode<synchronous>, transform_indices = @transform_1, window_bounds = array<i64: 256, 128>}, {transform_indices = @transform_2, window_bounds = array<i64: 512, 128>}, {transform_indices = @transform_3, window_bounds = array<i64: 1, 8, 128>}]} {
    %c0 = arith.constant 0 : index
    %c0_0 = arith.constant 0 : index
    %0 = vector.load %arg1[%c0, %c0_0] : memref<512x256xbf16, #tpu.memory_space<vmem>>, vector<512x256xbf16>
    %c0_1 = arith.constant 0 : index
    %c0_2 = arith.constant 0 : index
    %1 = vector.load %arg2[%c0_1, %c0_2] : memref<256x128xbf16, #tpu.memory_space<vmem>>, vector<256x128xbf16>
    %cst = arith.constant dense<0.000000e+00> : vector<512x128xf32>
    %2 = tpu.matmul %0, %1, %cst {dimension_numbers = #tpu.dot_dimension_numbers<[1], [0], [0], [1], [0, 0, 1, 1], [], []>} : vector<512x256xbf16>, vector<256x128xbf16>, vector<512x128xf32> -> vector<512x128xf32>
    %c0_3 = arith.constant 0 : index
    %c0_4 = arith.constant 0 : index
    %3 = vector.load %arg3[%c0_3, %c0_4] : memref<512x128xf32, #tpu.memory_space<vmem>>, vector<512x128xf32>
    tpu.vector_store %arg3[%c0_3, %c0_4], %2 {strides = array<i32>} : memref<512x128xf32, #tpu.memory_space<vmem>>, vector<512x128xf32>,
    %cst_5 = arith.constant dense<0.000000e+00> : vector<128xf32>
    %4 = vector.multi_reduction <add>, %2, %cst_5 [0] : vector<512x128xf32> to vector<128xf32>
    %5 = vector.shape_cast %4 : vector<128xf32> to vector<1x128xf32>
    %6 = arith.mulf %2, %2 : vector<512x128xf32>
    %cst_6 = arith.constant dense<0.000000e+00> : vector<128xf32>
    %7 = vector.multi_reduction <add>, %6, %cst_6 [0] : vector<512x128xf32> to vector<128xf32>
    %8 = vector.shape_cast %7 : vector<128xf32> to vector<1x128xf32>
    %9 = tpu.iota {dimensions = array<i32: 0>} : vector<8x128xi32>
    %c0_i32 = arith.constant 0 : i32
    %10 = vector.broadcast %c0_i32 : i32 to vector<8x128xi32>
    %11 = arith.cmpi eq, %9, %10 : vector<8x128xi32>
    %c1_i32 = arith.constant 1 : i32
    %12 = vector.broadcast %c1_i32 : i32 to vector<8x128xi32>
    %13 = arith.cmpi eq, %9, %12 : vector<8x128xi32>
    %cst_7 = arith.constant 0.000000e+00 : f32
    %14 = vector.shape_cast %8 : vector<1x128xf32> to vector<1x128xf32>
    %15 = vector.broadcast %14 : vector<1x128xf32> to vector<8x128xf32>
    %16 = vector.broadcast %cst_7 : f32 to vector<8x128xf32>
    %17 = arith.select %13, %15, %16 : vector<8x128xi1>, vector<8x128xf32>
    %18 = vector.shape_cast %5 : vector<1x128xf32> to vector<1x128xf32>
    %19 = vector.broadcast %18 : vector<1x128xf32> to vector<8x128xf32>
    %20 = arith.select %11, %19, %17 : vector<8x128xi1>, vector<8x128xf32>
    %21 = vector.shape_cast %20 : vector<8x128xf32> to vector<1x8x128xf32>
    %c0_8 = arith.constant 0 : index
    %c0_9 = arith.constant 0 : index
    %c0_10 = arith.constant 0 : index
    %22 = vector.load %arg4[%c0_8, %c0_9, %c0_10] : memref<1x8x128xf32, #tpu.memory_space<vmem>>, vector<1x8x128xf32>
    tpu.vector_store %arg4[%c0_8, %c0_9, %c0_10], %21 {strides = array<i32>} : memref<1x8x128xf32, #tpu.memory_space<vmem>>, vector<1x8x128xf32>,
    return
  }
  func.func @transform_0(%arg0: i32) -> (i32, i32) {
    %c0_i32 = arith.constant 0 : i32
    %c0_i32_0 = arith.constant 0 : i32
    return %arg0, %c0_i32 : i32, i32
  }
  func.func @transform_1(%arg0: i32) -> (i32, i32) {
    %c0_i32 = arith.constant 0 : i32
    %c0_i32_0 = arith.constant 0 : i32
    %c0_i32_1 = arith.constant 0 : i32
    return %c0_i32, %c0_i32_0 : i32, i32
  }
  func.func @transform_2(%arg0: i32) -> (i32, i32) {
    %c0_i32 = arith.constant 0 : i32
    %c0_i32_0 = arith.constant 0 : i32
    return %arg0, %c0_i32 : i32, i32
  }
  func.func @transform_3(%arg0: i32) -> (i32, i32, i32) {
    %c0_i32 = arith.constant 0 : i32
    %c0_i32_0 = arith.constant 0 : i32
    %c0_i32_1 = arith.constant 0 : i32
    return %arg0, %c0_i32, %c0_i32_0 : i32, i32, i32
  }
}

</mosaic_0001>

<llo_original>
// kernel: tpu_custom_call.1
$region0: #{tpu_custom_call.1}
  #allocation0 [shape = 'u32[]', space=smem, size = 0x4, offset = 0x4, fixed_abs, tag = 'smem constant byte address 0x4 - core index']
  #allocation1 [shape = 'u32[144,128]{1,0:T(1,128)}', space=vmem, size = 0x12000, scoped, tag = 'internal scratch']
  %s0 = inlined_call_operand.hbm [shape: bf16[1024,256], index: 0, kind: input, shape index: {}]
  %s1 = inlined_call_operand.hbm [shape: bf16[256,128], index: 1, kind: input, shape index: {}]
  %s2 = inlined_call_operand.hbm [shape: f32[1024,128], index: 2, kind: output, shape index: {0}]
  %s3 = inlined_call_operand.hbm [shape: f32[2,8,128], index: 3, kind: output, shape index: {1}]
  %4 = xla_tuple %s2, %s3
  %s5 = sld [smem:[#allocation0]]
  $region57: #{tpu_custom_call.1} parent=0
    _
  %s7 = ssub.s32 1, %s5
  %s8 = scalar_select 0, %s7, %s5
  $region1: #{tpu_custom_call.1} parent=0
    #allocation2 [shape = 'u8[524288]{0}', space=vmem, size = 0x80000, scoped, tag = 'input window, operand 0']
    #allocation3 [shape = 's32[2]{0}', space=sflag, size = 0x8, scoped, tag = 'scoped memory for tpu_custom_call.1']
    #allocation4 [shape = 's32[2]{0}', space=sflag, size = 0x8, scoped, tag = 'scoped memory for tpu_custom_call.1']
    #allocation5 [shape = 'u8[65536]{0}', space=vmem, size = 0x10000, scoped, tag = 'input window, operand 1, single buffered']
    #allocation6 [shape = 's32[1]{0}', space=sflag, size = 0x4, scoped, tag = 'scoped memory for tpu_custom_call.1']
    #allocation7 [shape = 'u8[524288]{0}', space=vmem, size = 0x80000, scoped, tag = 'output window, operand 0']
    #allocation8 [shape = 'u8[8192]{0}', space=vmem, size = 0x2000, scoped, tag = 'output window, operand 1']
    #allocation9 [shape = 's32[2]{0}', space=sflag, size = 0x8, scoped, tag = 'scoped memory for tpu_custom_call.1']
    %9 = vsyncpa [#allocation3], 0
    %s10 = scalar_lea.sflag [#allocation3], 1
    %11 = vsyncpa %s10, 0
    %12 = vsyncpa [#allocation6], 0
    %13 = vsyncpa [#allocation4], 0
    %s14 = scalar_lea.sflag [#allocation4], 1
    %15 = vsyncpa %s14, 0
    %16 = vsyncpa [#allocation9], 0
    %s17 = scalar_lea.sflag [#allocation9], 1
    %18 = vsyncpa %s17, 0
    loop: start=0, step=1, limit=4
    $region2: #{tpu_custom_call.1} parent=1 // loop_pre_header
      _
    $region3: #{tpu_custom_call.1} parent=1 // loop_header
      %s20 = sphi 0, %s24
      %p21 = scmp.ge.s32.totalorder %s20, 4
      %s30 = sphi 0, %s32
      %s33 = sphi 0, %s30
      %s34 = sphi 0, %s33
      %s50 = sphi 0, %s34
      %s54 = sphi 0, %s54
      %s56 = sphi 0, %s54
      %s57 = sphi 0, %s56
      %s71 = sphi 0, %s57
      %s77 = sphi 0, %s79
      %s80 = sphi 0, %s77
      %s81 = sphi 0, %s80
      %s97 = sphi 0, %s81
      %s103 = sphi 0, %s105
      %s106 = sphi 0, %s103
      %s107 = sphi 0, %s106
      %s123 = sphi 0, %s107
    $region4: #{tpu_custom_call.1} parent=1 // loop_header_branch
      %23 = sbr.rel (%p21) target = $region8
    $region5: #{tpu_custom_call.1} parent=1 // loop_body
      %s25 = ssub.s32 %s20, 1
      %s26 = ssub.s32 %s20, 2
      %s27 = sadd.s32 %s20, 1
      %s28 = ssub.s32 %s20, %s27
      %p29 = scmp.eq.s32.totalorder %s28, 0
      %s31 = sadd.s32 %s30, 1
      %s32 = scalar_select %p29, %s30, %s31
      %p35 = pneg %p29
      %p36 = scmp.eq.s32.totalorder %s20, 1
      %p37 = por %p35, %p36
      %p38 = scmp.ne.s32.totalorder %s30, %s33
      %p39 = scmp.eq.s32.totalorder %s20, 0
      %p40 = por %p38, %p39
      %p41 = scmp.ne.s32.totalorder %s30, %s33
      %p42 = scmp.eq.s32.totalorder %s25, 1
      %p43 = por %p41, %p42
      %p44 = scmp.ne.s32.totalorder %s33, %s34
      %p45 = scmp.eq.s32.totalorder %s25, 0
      %p46 = por %p44, %p45
      %p47 = scmp.ne.s32.totalorder %s33, %s34
      %p48 = scmp.eq.s32.totalorder %s26, 1
      %p49 = por %p47, %p48
      %p51 = scmp.ne.s32.totalorder %s34, %s50
      %p52 = scmp.eq.s32.totalorder %s26, 0
      %p53 = por %p51, %p52
      %s55 = sadd.s32 %s54, 1
      %p58 = scmp.eq.s32.totalorder %s20, 1
      %p59 = scmp.ne.s32.totalorder %s54, %s56
      %p60 = scmp.eq.s32.totalorder %s20, 0
      %p61 = por %p59, %p60
      %p62 = scmp.ne.s32.totalorder %s54, %s56
      %p63 = scmp.eq.s32.totalorder %s25, 1
      %p64 = por %p62, %p63
      %p65 = scmp.ne.s32.totalorder %s56, %s57
      %p66 = scmp.eq.s32.totalorder %s25, 0
      %p67 = por %p65, %p66
      %p68 = scmp.ne.s32.totalorder %s56, %s57
      %p69 = scmp.eq.s32.totalorder %s26, 1
      %p70 = por %p68, %p69
      %p72 = scmp.ne.s32.totalorder %s57, %s71
      %p73 = scmp.eq.s32.totalorder %s26, 0
      %p74 = por %p72, %p73
      %s75 = ssub.s32 %s20, %s27
      %p76 = scmp.eq.s32.totalorder %s75, 0
      %s78 = sadd.s32 %s77, 1
      %s79 = scalar_select %p76, %s77, %s78
      %p82 = pneg %p76
      %p83 = scmp.eq.s32.totalorder %s20, 1
      %p84 = por %p82, %p83
      %p85 = scmp.ne.s32.totalorder %s77, %s80
      %p86 = scmp.eq.s32.totalorder %s20, 0
      %p87 = por %p85, %p86
      %p88 = scmp.ne.s32.totalorder %s77, %s80
      %p89 = scmp.eq.s32.totalorder %s25, 1
      %p90 = por %p88, %p89
      %p91 = scmp.ne.s32.totalorder %s80, %s81
      %p92 = scmp.eq.s32.totalorder %s25, 0
      %p93 = por %p91, %p92
      %p94 = scmp.ne.s32.totalorder %s80, %s81
      %p95 = scmp.eq.s32.totalorder %s26, 1
      %p96 = por %p94, %p95
      %p98 = scmp.ne.s32.totalorder %s81, %s97
      %p99 = scmp.eq.s32.totalorder %s26, 0
      %p100 = por %p98, %p99
      %s101 = ssub.s32 %s20, %s27
      %p102 = scmp.eq.s32.totalorder %s101, 0
      %s104 = sadd.s32 %s103, 1
      %s105 = scalar_select %p102, %s103, %s104
      %p108 = pneg %p102
      %p109 = scmp.eq.s32.totalorder %s20, 1
      %p110 = por %p108, %p109
      %p111 = scmp.ne.s32.totalorder %s103, %s106
      %p112 = scmp.eq.s32.totalorder %s20, 0
      %p113 = por %p111, %p112
      %p114 = scmp.ne.s32.totalorder %s103, %s106
      %p115 = scmp.eq.s32.totalorder %s25, 1
      %p116 = por %p114, %p115
      %p117 = scmp.ne.s32.totalorder %s106, %s107
      %p118 = scmp.eq.s32.totalorder %s25, 0
      %p119 = por %p117, %p118
      %p120 = scmp.ne.s32.totalorder %s106, %s107
      %p121 = scmp.eq.s32.totalorder %s26, 1
      %p122 = por %p120, %p121
      %p124 = scmp.ne.s32.totalorder %s107, %s123
      %p125 = scmp.eq.s32.totalorder %s26, 0
      %p126 = por %p124, %p125
      %p127 = scmp.le.s32.totalorder 1, %s20
      %p128 = scmp.lt.s32.totalorder %s20, 3
      %p129 = pnand %p127, %p128
      %p130 = pneg %p129
      // Predicated region
      $region9: #{tpu_custom_call.1} parent=5 // pred_check
        _
      $region10: #{tpu_custom_call.1} parent=5 // pred_check_branch
        %132 = sbr.rel (%p129) target = $region12
      $region11: #{tpu_custom_call.1} parent=5 // pred_region
        %s133 = ssub.s32 %s20, 1
        // Predicated region
        $region13: #{tpu_custom_call.1} parent=11 // pred_check
          %p134 = pneg %p67
        $region14: #{tpu_custom_call.1} parent=11 // pred_check_branch
          %136 = sbr.rel (%p134) target = $region16
        $region15: #{tpu_custom_call.1} parent=11 // pred_region
          %s138 = ssub.s32 2048, 2048
          %139 = vsyncadd [#allocation6], %s138
          %s140 = sshll.u32 [#allocation5], 4
          %s141 = int_to_ptr.vmem [resolvable:$true] %s140
          %146 = dma.hbm_to_vmem [thread:$0]  %s1, 2048, %s141, [#allocation6], 64, 64, 4
        $region16: #{tpu_custom_call.1} parent=11 // pred_fallthru
          _
      $region12: #{tpu_custom_call.1} parent=5 // pred_fallthru
        _
      %p147 = scmp.lt.s32.totalorder %s20, 2
      // Predicated region
      $region17: #{tpu_custom_call.1} parent=5 // pred_check
        %p148 = pneg %p147
      $region18: #{tpu_custom_call.1} parent=5 // pred_check_branch
        %150 = sbr.rel (%p148) target = $region20
      $region19: #{tpu_custom_call.1} parent=5 // pred_region
        // Predicated region
        $region21: #{tpu_custom_call.1} parent=19 // pred_check
          %p151 = pneg %p40
        $region22: #{tpu_custom_call.1} parent=19 // pred_check_branch
          %153 = sbr.rel (%p151) target = $region24
        $region23: #{tpu_custom_call.1} parent=19 // pred_region
          %s154 = sand.u32 %s30, 1
          %s155 = scalar_lea.sflag [#allocation3], %s154
          %s156 = sand.u32 %s30, 1
          %s157 = smul.addr %s156, 512
          %s158 = scalar_lea.vmem [#allocation2], %s157
          %s159 = smul.u32 64, %s20
          %s161 = ssub.s32 8192, 8192
          %162 = vsyncadd %s155, %s161
          %s163 = smul.addr %s159, 2
          %s164 = smul.addr %s163, 64
          %s165 = scalar_lea.hbm %s0, %s164
          %s166 = sshll.u32 %s158, 4
          %s167 = int_to_ptr.vmem [resolvable:$true] %s166
          %172 = dma.hbm_to_vmem [thread:$0]  %s165, 8192, %s167, %s155, 128, 128, 8
        $region24: #{tpu_custom_call.1} parent=19 // pred_fallthru
          _
      $region20: #{tpu_custom_call.1} parent=5 // pred_fallthru
        _
      %p173 = scmp.le.s32.totalorder 1, %s20
      %p174 = scmp.lt.s32.totalorder %s20, 3
      %p175 = pnand %p173, %p174
      %p176 = pneg %p175
      // Predicated region
      $region25: #{tpu_custom_call.1} parent=5 // pred_check
        _
      $region26: #{tpu_custom_call.1} parent=5 // pred_check_branch
        %178 = sbr.rel (%p175) target = $region28
      $region27: #{tpu_custom_call.1} parent=5 // pred_region
        %s179 = ssub.s32 %s20, 1
        %s180 = sand.u32 %s33, 1
        %s181 = scalar_lea.sflag [#allocation3], %s180
        %s182 = sand.u32 %s33, 1
        %s183 = smul.addr %s182, 512
        %s184 = scalar_lea.vmem [#allocation2], %s183
        // Predicated region
        $region29: #{tpu_custom_call.1} parent=27 // pred_check
          %p185 = pneg %p46
        $region30: #{tpu_custom_call.1} parent=27 // pred_check_branch
          %187 = sbr.rel (%p185) target = $region32
        $region31: #{tpu_custom_call.1} parent=27 // pred_region
          %188 = dma.done %s181, 8192
        $region32: #{tpu_custom_call.1} parent=27 // pred_fallthru
          _
        // Predicated region
        $region33: #{tpu_custom_call.1} parent=27 // pred_check
          %p189 = pneg %p67
        $region34: #{tpu_custom_call.1} parent=27 // pred_check_branch
          %191 = sbr.rel (%p189) target = $region36
        $region35: #{tpu_custom_call.1} parent=27 // pred_region
          %192 = dma.done [#allocation6], 2048
        $region36: #{tpu_custom_call.1} parent=27 // pred_fallthru
          _
        %s193 = sand.u32 %s33, 1
        %s194 = scalar_lea.sflag [#allocation3], %s193
        %s195 = sand.u32 %s33, 1
        %s196 = smul.addr %s195, 512
        %s197 = scalar_lea.vmem [#allocation2], %s196
        %p198 = pneg %p46
        %p199 = pneg %p43
        %p200 = pneg %p67
        %p201 = pneg %p64
        %p202 = pneg %p93
        %p203 = pneg %p90
        %s204 = sand.u32 %s80, 1
        %s205 = scalar_lea.sflag [#allocation4], %s204
        %s206 = sand.u32 %s80, 1
        %s207 = smul.addr %s206, 512
        %s208 = scalar_lea.vmem [#allocation7], %s207
        %p209 = pneg %p119
        %p210 = pneg %p116
        %s211 = sand.u32 %s106, 1
        %s212 = scalar_lea.sflag [#allocation9], %s211
        %s213 = sand.u32 %s106, 1
        %s214 = smul.addr %s213, 8
        %s215 = scalar_lea.vmem [#allocation8], %s214
        %s216 = smul.u32 64, %s25
        %s217 = smul.u32 64, %s25
        %v219 = vld [vmem:[%s184] sm:$0xff]
        %v220 = vld [vmem:[%s184 + $0x8] sm:$0xff]
        %v221 = vld [vmem:[%s184 + $0x10] sm:$0xff]
        %v222 = vld [vmem:[%s184 + $0x18] sm:$0xff]
        %v223 = vld [vmem:[%s184 + $0x20] sm:$0xff]
        %v224 = vld [vmem:[%s184 + $0x28] sm:$0xff]
        %v225 = vld [vmem:[%s184 + $0x30] sm:$0xff]
        %v226 = vld [vmem:[%s184 + $0x38] sm:$0xff]
        %v227 = vld [vmem:[%s184 + $0x40] sm:$0xff]
        %v228 = vld [vmem:[%s184 + $0x48] sm:$0xff]
        %v229 = vld [vmem:[%s184 + $0x50] sm:$0xff]
        %v230 = vld [vmem:[%s184 + $0x58] sm:$0xff]
        %v231 = vld [vmem:[%s184 + $0x60] sm:$0xff]
        %v232 = vld [vmem:[%s184 + $0x68] sm:$0xff]
        %v233 = vld [vmem:[%s184 + $0x70] sm:$0xff]
        %v234 = vld [vmem:[%s184 + $0x78] sm:$0xff]
        %v235 = vld [vmem:[%s184 + $0x80] sm:$0xff]
        %v236 = vld [vmem:[%s184 + $0x88] sm:$0xff]
        %v237 = vld [vmem:[%s184 + $0x90] sm:$0xff]
        %v238 = vld [vmem:[%s184 + $0x98] sm:$0xff]
        %v239 = vld [vmem:[%s184 + $0xa0] sm:$0xff]
        %v240 = vld [vmem:[%s184 + $0xa8] sm:$0xff]
        %v241 = vld [vmem:[%s184 + $0xb0] sm:$0xff]
        %v242 = vld [vmem:[%s184 + $0xb8] sm:$0xff]
        %v243 = vld [vmem:[%s184 + $0xc0] sm:$0xff]
        %v244 = vld [vmem:[%s184 + $0xc8] sm:$0xff]
        %v245 = vld [vmem:[%s184 + $0xd0] sm:$0xff]
        %v246 = vld [vmem:[%s184 + $0xd8] sm:$0xff]
        %v247 = vld [vmem:[%s184 + $0xe0] sm:$0xff]
        %v248 = vld [vmem:[%s184 + $0xe8] sm:$0xff]
        %v249 = vld [vmem:[%s184 + $0xf0] sm:$0xff]
        %v250 = vld [vmem:[%s184 + $0xf8] sm:$0xff]
        %v251 = vld [vmem:[%s184 + $0x100] sm:$0xff]
        %v252 = vld [vmem:[%s184 + $0x108] sm:$0xff]
        %v253 = vld [vmem:[%s184 + $0x110] sm:$0xff]
        %v254 = vld [vmem:[%s184 + $0x118] sm:$0xff]
        %v255 = vld [vmem:[%s184 + $0x120] sm:$0xff]
        %v256 = vld [vmem:[%s184 + $0x128] sm:$0xff]
        %v257 = vld [vmem:[%s184 + $0x130] sm:$0xff]
        %v258 = vld [vmem:[%s184 + $0x138] sm:$0xff]
        %v259 = vld [vmem:[%s184 + $0x140] sm:$0xff]
        %v260 = vld [vmem:[%s184 + $0x148] sm:$0xff]
        %v261 = vld [vmem:[%s184 + $0x150] sm:$0xff]
        %v262 = vld [vmem:[%s184 + $0x158] sm:$0xff]
        %v263 = vld [vmem:[%s184 + $0x160] sm:$0xff]
        %v264 = vld [vmem:[%s184 + $0x168] sm:$0xff]
        %v265 = vld [vmem:[%s184 + $0x170] sm:$0xff]
        %v266 = vld [vmem:[%s184 + $0x178] sm:$0xff]
        %v267 = vld [vmem:[%s184 + $0x180] sm:$0xff]
        %v268 = vld [vmem:[%s184 + $0x188] sm:$0xff]
        %v269 = vld [vmem:[%s184 + $0x190] sm:$0xff]
        %v270 = vld [vmem:[%s184 + $0x198] sm:$0xff]
        %v271 = vld [vmem:[%s184 + $0x1a0] sm:$0xff]
        %v272 = vld [vmem:[%s184 + $0x1a8] sm:$0xff]
        %v273 = vld [vmem:[%s184 + $0x1b0] sm:$0xff]
        %v274 = vld [vmem:[%s184 + $0x1b8] sm:$0xff]
        %v275 = vld [vmem:[%s184 + $0x1c0] sm:$0xff]
        %v276 = vld [vmem:[%s184 + $0x1c8] sm:$0xff]
        %v277 = vld [vmem:[%s184 + $0x1d0] sm:$0xff]
        %v278 = vld [vmem:[%s184 + $0x1d8] sm:$0xff]
        %v279 = vld [vmem:[%s184 + $0x1e0] sm:$0xff]
        %v280 = vld [vmem:[%s184 + $0x1e8] sm:$0xff]
        %v281 = vld [vmem:[%s184 + $0x1f0] sm:$0xff]
        %v282 = vld [vmem:[%s184 + $0x1f8] sm:$0xff]
        %v283 = vld [vmem:[#allocation5] sm:$0xf]
        %v284 = vld [vmem:[#allocation5 + $0x4] sm:$0xf]
        %v285 = vld [vmem:[#allocation5 + $0x8] sm:$0xf]
        %v286 = vld [vmem:[#allocation5 + $0xc] sm:$0xf]
        %v287 = vld [vmem:[#allocation5 + $0x10] sm:$0xf]
        %v288 = vld [vmem:[#allocation5 + $0x14] sm:$0xf]
        %v289 = vld [vmem:[#allocation5 + $0x18] sm:$0xf]
        %v290 = vld [vmem:[#allocation5 + $0x1c] sm:$0xf]
        %v291 = vld [vmem:[#allocation5 + $0x20] sm:$0xf]
        %v292 = vld [vmem:[#allocation5 + $0x24] sm:$0xf]
        %v293 = vld [vmem:[#allocation5 + $0x28] sm:$0xf]
        %v294 = vld [vmem:[#allocation5 + $0x2c] sm:$0xf]
        %v295 = vld [vmem:[#allocation5 + $0x30] sm:$0xf]
        %v296 = vld [vmem:[#allocation5 + $0x34] sm:$0xf]
        %v297 = vld [vmem:[#allocation5 + $0x38] sm:$0xf]
        %v298 = vld [vmem:[#allocation5 + $0x3c] sm:$0xf]
        %v299 = vld [vmem:[#allocation5 + $0x40] sm:$0xf]
        %v300 = vld [vmem:[#allocation5 + $0x44] sm:$0xf]
        %v301 = vld [vmem:[#allocation5 + $0x48] sm:$0xf]
        %v302 = vld [vmem:[#allocation5 + $0x4c] sm:$0xf]
        %v303 = vld [vmem:[#allocation5 + $0x50] sm:$0xf]
        %v304 = vld [vmem:[#allocation5 + $0x54] sm:$0xf]
        %v305 = vld [vmem:[#allocation5 + $0x58] sm:$0xf]
        %v306 = vld [vmem:[#allocation5 + $0x5c] sm:$0xf]
        %v307 = vld [vmem:[#allocation5 + $0x60] sm:$0xf]
        %v308 = vld [vmem:[#allocation5 + $0x64] sm:$0xf]
        %v309 = vld [vmem:[#allocation5 + $0x68] sm:$0xf]
        %v310 = vld [vmem:[#allocation5 + $0x6c] sm:$0xf]
        %v311 = vld [vmem:[#allocation5 + $0x70] sm:$0xf]
        %v312 = vld [vmem:[#allocation5 + $0x74] sm:$0xf]
        %v313 = vld [vmem:[#allocation5 + $0x78] sm:$0xf]
        %v314 = vld [vmem:[#allocation5 + $0x7c] sm:$0xf]
        %v379 = vunpack.c.l.b16 %v219
        %v380 = vunpack.c.h.b16 %v219
        %v381 = vunpack.c.l.b16 %v220
        %v382 = vunpack.c.h.b16 %v220
        %v383 = vunpack.c.l.b16 %v221
        %v384 = vunpack.c.h.b16 %v221
        %v385 = vunpack.c.l.b16 %v222
        %v386 = vunpack.c.h.b16 %v222
        %v387 = vunpack.c.l.b16 %v223
        %v388 = vunpack.c.h.b16 %v223
        %v389 = vunpack.c.l.b16 %v224
        %v390 = vunpack.c.h.b16 %v224
        %v391 = vunpack.c.l.b16 %v225
        %v392 = vunpack.c.h.b16 %v225
        %v393 = vunpack.c.l.b16 %v226
        %v394 = vunpack.c.h.b16 %v226
        %v395 = vunpack.c.l.b16 %v227
        %v396 = vunpack.c.h.b16 %v227
        %v397 = vunpack.c.l.b16 %v228
        %v398 = vunpack.c.h.b16 %v228
        %v399 = vunpack.c.l.b16 %v229
        %v400 = vunpack.c.h.b16 %v229
        %v401 = vunpack.c.l.b16 %v230
        %v402 = vunpack.c.h.b16 %v230
        %v403 = vunpack.c.l.b16 %v231
        %v404 = vunpack.c.h.b16 %v231
        %v405 = vunpack.c.l.b16 %v232
        %v406 = vunpack.c.h.b16 %v232
        %v407 = vunpack.c.l.b16 %v233
        %v408 = vunpack.c.h.b16 %v233
        %v409 = vunpack.c.l.b16 %v234
        %v410 = vunpack.c.h.b16 %v234
        %v411 = vunpack.c.l.b16 %v235
        %v412 = vunpack.c.h.b16 %v235
        %v413 = vunpack.c.l.b16 %v236
        %v414 = vunpack.c.h.b16 %v236
        %v415 = vunpack.c.l.b16 %v237
        %v416 = vunpack.c.h.b16 %v237
        %v417 = vunpack.c.l.b16 %v238
        %v418 = vunpack.c.h.b16 %v238
        %v419 = vunpack.c.l.b16 %v239
        %v420 = vunpack.c.h.b16 %v239
        %v421 = vunpack.c.l.b16 %v240
        %v422 = vunpack.c.h.b16 %v240
        %v423 = vunpack.c.l.b16 %v241
        %v424 = vunpack.c.h.b16 %v241
        %v425 = vunpack.c.l.b16 %v242
        %v426 = vunpack.c.h.b16 %v242
        %v427 = vunpack.c.l.b16 %v243
        %v428 = vunpack.c.h.b16 %v243
        %v429 = vunpack.c.l.b16 %v244
        %v430 = vunpack.c.h.b16 %v244
        %v431 = vunpack.c.l.b16 %v245
        %v432 = vunpack.c.h.b16 %v245
        %v433 = vunpack.c.l.b16 %v246
        %v434 = vunpack.c.h.b16 %v246
        %v435 = vunpack.c.l.b16 %v247
        %v436 = vunpack.c.h.b16 %v247
        %v437 = vunpack.c.l.b16 %v248
        %v438 = vunpack.c.h.b16 %v248
        %v439 = vunpack.c.l.b16 %v249
        %v440 = vunpack.c.h.b16 %v249
        %v441 = vunpack.c.l.b16 %v250
        %v442 = vunpack.c.h.b16 %v250
        %v443 = vunpack.c.l.b16 %v251
        %v444 = vunpack.c.h.b16 %v251
        %v445 = vunpack.c.l.b16 %v252
        %v446 = vunpack.c.h.b16 %v252
        %v447 = vunpack.c.l.b16 %v253
        %v448 = vunpack.c.h.b16 %v253
        %v449 = vunpack.c.l.b16 %v254
        %v450 = vunpack.c.h.b16 %v254
        %v451 = vunpack.c.l.b16 %v255
        %v452 = vunpack.c.h.b16 %v255
        %v453 = vunpack.c.l.b16 %v256
        %v454 = vunpack.c.h.b16 %v256
        %v455 = vunpack.c.l.b16 %v257
        %v456 = vunpack.c.h.b16 %v257
        %v457 = vunpack.c.l.b16 %v258
        %v458 = vunpack.c.h.b16 %v258
        %v459 = vunpack.c.l.b16 %v259
        %v460 = vunpack.c.h.b16 %v259
        %v461 = vunpack.c.l.b16 %v260
        %v462 = vunpack.c.h.b16 %v260
        %v463 = vunpack.c.l.b16 %v261
        %v464 = vunpack.c.h.b16 %v261
        %v465 = vunpack.c.l.b16 %v262
        %v466 = vunpack.c.h.b16 %v262
        %v467 = vunpack.c.l.b16 %v263
        %v468 = vunpack.c.h.b16 %v263
        %v469 = vunpack.c.l.b16 %v264
        %v470 = vunpack.c.h.b16 %v264
        %v471 = vunpack.c.l.b16 %v265
        %v472 = vunpack.c.h.b16 %v265
        %v473 = vunpack.c.l.b16 %v266
        %v474 = vunpack.c.h.b16 %v266
        %v475 = vunpack.c.l.b16 %v267
        %v476 = vunpack.c.h.b16 %v267
        %v477 = vunpack.c.l.b16 %v268
        %v478 = vunpack.c.h.b16 %v268
        %v479 = vunpack.c.l.b16 %v269
        %v480 = vunpack.c.h.b16 %v269
        %v481 = vunpack.c.l.b16 %v270
        %v482 = vunpack.c.h.b16 %v270
        %v483 = vunpack.c.l.b16 %v271
        %v484 = vunpack.c.h.b16 %v271
        %v485 = vunpack.c.l.b16 %v272
        %v486 = vunpack.c.h.b16 %v272
        %v487 = vunpack.c.l.b16 %v273
        %v488 = vunpack.c.h.b16 %v273
        %v489 = vunpack.c.l.b16 %v274
        %v490 = vunpack.c.h.b16 %v274
        %v491 = vunpack.c.l.b16 %v275
        %v492 = vunpack.c.h.b16 %v275
        %v493 = vunpack.c.l.b16 %v276
        %v494 = vunpack.c.h.b16 %v276
        %v495 = vunpack.c.l.b16 %v277
        %v496 = vunpack.c.h.b16 %v277
        %v497 = vunpack.c.l.b16 %v278
        %v498 = vunpack.c.h.b16 %v278
        %v499 = vunpack.c.l.b16 %v279
        %v500 = vunpack.c.h.b16 %v279
        %v501 = vunpack.c.l.b16 %v280
        %v502 = vunpack.c.h.b16 %v280
        %v503 = vunpack.c.l.b16 %v281
        %v504 = vunpack.c.h.b16 %v281
        %v505 = vunpack.c.l.b16 %v282
        %v506 = vunpack.c.h.b16 %v282
        %v507 = vpack.c.b16 %v381, %v379
        %v508 = vpack.c.b16 %v382, %v380
        %v509 = vpack.c.b16 %v385, %v383
        %v510 = vpack.c.b16 %v386, %v384
        %v511 = vpack.c.b16 %v389, %v387
        %v512 = vpack.c.b16 %v390, %v388
        %v513 = vpack.c.b16 %v393, %v391
        %v514 = vpack.c.b16 %v394, %v392
        %v515 = vpack.c.b16 %v397, %v395
        %v516 = vpack.c.b16 %v398, %v396
        %v517 = vpack.c.b16 %v401, %v399
        %v518 = vpack.c.b16 %v402, %v400
        %v519 = vpack.c.b16 %v405, %v403
        %v520 = vpack.c.b16 %v406, %v404
        %v521 = vpack.c.b16 %v409, %v407
        %v522 = vpack.c.b16 %v410, %v408
        %v523 = vpack.c.b16 %v413, %v411
        %v524 = vpack.c.b16 %v414, %v412
        %v525 = vpack.c.b16 %v417, %v415
        %v526 = vpack.c.b16 %v418, %v416
        %v527 = vpack.c.b16 %v421, %v419
        %v528 = vpack.c.b16 %v422, %v420
        %v529 = vpack.c.b16 %v425, %v423
        %v530 = vpack.c.b16 %v426, %v424
        %v531 = vpack.c.b16 %v429, %v427
        %v532 = vpack.c.b16 %v430, %v428
        %v533 = vpack.c.b16 %v433, %v431
        %v534 = vpack.c.b16 %v434, %v432
        %v535 = vpack.c.b16 %v437, %v435
        %v536 = vpack.c.b16 %v438, %v436
        %v537 = vpack.c.b16 %v441, %v439
        %v538 = vpack.c.b16 %v442, %v440
        %v539 = vpack.c.b16 %v445, %v443
        %v540 = vpack.c.b16 %v446, %v444
        %v541 = vpack.c.b16 %v449, %v447
        %v542 = vpack.c.b16 %v450, %v448
        %v543 = vpack.c.b16 %v453, %v451
        %v544 = vpack.c.b16 %v454, %v452
        %v545 = vpack.c.b16 %v457, %v455
        %v546 = vpack.c.b16 %v458, %v456
        %v547 = vpack.c.b16 %v461, %v459
        %v548 = vpack.c.b16 %v462, %v460
        %v549 = vpack.c.b16 %v465, %v463
        %v550 = vpack.c.b16 %v466, %v464
        %v551 = vpack.c.b16 %v469, %v467
        %v552 = vpack.c.b16 %v470, %v468
        %v553 = vpack.c.b16 %v473, %v471
        %v554 = vpack.c.b16 %v474, %v472
        %v555 = vpack.c.b16 %v477, %v475
        %v556 = vpack.c.b16 %v478, %v476
        %v557 = vpack.c.b16 %v481, %v479
        %v558 = vpack.c.b16 %v482, %v480
        %v559 = vpack.c.b16 %v485, %v483
        %v560 = vpack.c.b16 %v486, %v484
        %v561 = vpack.c.b16 %v489, %v487
        %v562 = vpack.c.b16 %v490, %v488
        %v563 = vpack.c.b16 %v493, %v491
        %v564 = vpack.c.b16 %v494, %v492
        %v565 = vpack.c.b16 %v497, %v495
        %v566 = vpack.c.b16 %v498, %v496
        %v567 = vpack.c.b16 %v501, %v499
        %v568 = vpack.c.b16 %v502, %v500
        %v569 = vpack.c.b16 %v505, %v503
        %v570 = vpack.c.b16 %v506, %v504
        %v667 = vunpack.c.l.b16 %v283
        %v668 = vunpack.c.l.b16 %v284
        %v669 = vunpack.c.l.b16 %v285
        %v670 = vunpack.c.l.b16 %v286
        %v671 = vunpack.c.l.b16 %v287
        %v672 = vunpack.c.l.b16 %v288
        %v673 = vunpack.c.l.b16 %v289
        %v674 = vunpack.c.l.b16 %v290
        %v675 = vunpack.c.l.b16 %v291
        %v676 = vunpack.c.l.b16 %v292
        %v677 = vunpack.c.l.b16 %v293
        %v678 = vunpack.c.l.b16 %v294
        %v679 = vunpack.c.l.b16 %v295
        %v680 = vunpack.c.l.b16 %v296
        %v681 = vunpack.c.l.b16 %v297
        %v682 = vunpack.c.l.b16 %v298
        %v683 = vunpack.c.l.b16 %v299
        %v684 = vunpack.c.l.b16 %v300
        %v685 = vunpack.c.l.b16 %v301
        %v686 = vunpack.c.l.b16 %v302
        %v687 = vunpack.c.l.b16 %v303
        %v688 = vunpack.c.l.b16 %v304
        %v689 = vunpack.c.l.b16 %v305
        %v690 = vunpack.c.l.b16 %v306
        %v691 = vunpack.c.l.b16 %v307
        %v692 = vunpack.c.l.b16 %v308
        %v693 = vunpack.c.l.b16 %v309
        %v694 = vunpack.c.l.b16 %v310
        %v695 = vunpack.c.l.b16 %v311
        %v696 = vunpack.c.l.b16 %v312
        %v697 = vunpack.c.l.b16 %v313
        %v698 = vunpack.c.l.b16 %v314
        %v699 = vpack.c.b16 %v668, %v667
        %v700 = vpack.c.b16 %v670, %v669
        %v701 = vpack.c.b16 %v672, %v671
        %v702 = vpack.c.b16 %v674, %v673
        %v703 = vpack.c.b16 %v676, %v675
        %v704 = vpack.c.b16 %v678, %v677
        %v705 = vpack.c.b16 %v680, %v679
        %v706 = vpack.c.b16 %v682, %v681
        %v707 = vpack.c.b16 %v684, %v683
        %v708 = vpack.c.b16 %v686, %v685
        %v709 = vpack.c.b16 %v688, %v687
        %v710 = vpack.c.b16 %v690, %v689
        %v711 = vpack.c.b16 %v692, %v691
        %v712 = vpack.c.b16 %v694, %v693
        %v713 = vpack.c.b16 %v696, %v695
        %v714 = vpack.c.b16 %v698, %v697
        %731 = vmatprep.subr.bf16.mxu0 0
        %732 = vmatpush1.bf16.msra.mxu0 %v699
        %733 = vmatprep.subr.bf16.mxu0 0
        %734 = vmatpush1.bf16.msra.mxu0 %v700
        %735 = vmatprep.subr.bf16.mxu0 0
        %736 = vmatpush1.bf16.msra.mxu0 %v701
        %737 = vmatprep.subr.bf16.mxu0 0
        %738 = vmatpush1.bf16.msra.mxu0 %v702
        %739 = vmatprep.subr.bf16.mxu0 0
        %740 = vmatpush1.bf16.msra.mxu0 %v703
        %741 = vmatprep.subr.bf16.mxu0 0
        %742 = vmatpush1.bf16.msra.mxu0 %v704
        %743 = vmatprep.subr.bf16.mxu0 0
        %744 = vmatpush1.bf16.msra.mxu0 %v705
        %745 = vmatprep.subr.bf16.mxu0 0
        %746 = vmatpush1.bf16.msra.mxu0 %v706
        %747 = vmatprep.subr.bf16.mxu0 0
        %748 = vmatpush1.bf16.msra.mxu0 %v707
        %749 = vmatprep.subr.bf16.mxu0 0
        %750 = vmatpush1.bf16.msra.mxu0 %v708
        %751 = vmatprep.subr.bf16.mxu0 0
        %752 = vmatpush1.bf16.msra.mxu0 %v709
        %753 = vmatprep.subr.bf16.mxu0 0
        %754 = vmatpush1.bf16.msra.mxu0 %v710
        %755 = vmatprep.subr.bf16.mxu0 0
        %756 = vmatpush1.bf16.msra.mxu0 %v711
        %757 = vmatprep.subr.bf16.mxu0 0
        %758 = vmatpush1.bf16.msra.mxu0 %v712
        %759 = vmatprep.subr.bf16.mxu0 0
        %760 = vmatpush1.bf16.msra.mxu0 %v713
        %761 = vmatprep.subr.bf16.mxu0 0
        %762 = vmatpush1.bf16.msra.mxu0 %v714
        %763 = vmatprep.mubr.bf16.mxu0 %v508
        %764 = vmatmul.mubr.bf16.gmra.mrb[0].mxu0 %v507
        %v765 = vpop.f32.mrb[0].mxu0
        %v766 = vadd.f32 0.0, %v765
        %v767 = vpop.f32.mrb[0].mxu0
        %v768 = vpop.f32.mrb[0].mxu0
        %v769 = vadd.f32 0.0, %v768
        %v770 = vpop.f32.mrb[0].mxu0
        %771 = vmatprep.mubr.bf16.mxu0 %v510
        %772 = vmatmul.mubr.bf16.gmra.mrb[0].mxu0 %v509
        %v773 = vpop.f32.mrb[0].mxu0
        %v774 = vadd.f32 0.0, %v773
        %v775 = vpop.f32.mrb[0].mxu0
        %v776 = vpop.f32.mrb[0].mxu0
        %v777 = vadd.f32 0.0, %v776
        %v778 = vpop.f32.mrb[0].mxu0
        %779 = vmatprep.mubr.bf16.mxu0 %v512
        %780 = vmatmul.mubr.bf16.gmra.mrb[0].mxu0 %v511
        %v781 = vpop.f32.mrb[0].mxu0
        %v782 = vadd.f32 0.0, %v781
        %v783 = vpop.f32.mrb[0].mxu0
        %v784 = vpop.f32.mrb[0].mxu0
        %v785 = vadd.f32 0.0, %v784
        %v786 = vpop.f32.mrb[0].mxu0
        %787 = vmatprep.mubr.bf16.mxu0 %v514
        %788 = vmatmul.mubr.bf16.gmra.mrb[0].mxu0 %v513
        %v789 = vpop.f32.mrb[0].mxu0
        %v790 = vadd.f32 0.0, %v789
        %v791 = vpop.f32.mrb[0].mxu0
        %v792 = vpop.f32.mrb[0].mxu0
        %v793 = vadd.f32 0.0, %v792
        %v794 = vpop.f32.mrb[0].mxu0
        %795 = vmatprep.mubr.bf16.mxu0 %v516
        %796 = vmatmul.mubr.bf16.gmra.mrb[0].mxu0 %v515
        %v797 = vpop.f32.mrb[0].mxu0
        %v798 = vadd.f32 0.0, %v797
        %v799 = vpop.f32.mrb[0].mxu0
        %v800 = vpop.f32.mrb[0].mxu0
        %v801 = vadd.f32 0.0, %v800
        %v802 = vpop.f32.mrb[0].mxu0
        %803 = vmatprep.mubr.bf16.mxu0 %v518
        %804 = vmatmul.mubr.bf16.gmra.mrb[0].mxu0 %v517
        %v805 = vpop.f32.mrb[0].mxu0
        %v806 = vadd.f32 0.0, %v805
        %v807 = vpop.f32.mrb[0].mxu0
        %v808 = vpop.f32.mrb[0].mxu0
        %v809 = vadd.f32 0.0, %v808
        %v810 = vpop.f32.mrb[0].mxu0
        %811 = vmatprep.mubr.bf16.mxu0 %v520
        %812 = vmatmul.mubr.bf16.gmra.mrb[0].mxu0 %v519
        %v813 = vpop.f32.mrb[0].mxu0
        %v814 = vadd.f32 0.0, %v813
        %v815 = vpop.f32.mrb[0].mxu0
        %v816 = vpop.f32.mrb[0].mxu0
        %v817 = vadd.f32 0.0, %v816
        %v818 = vpop.f32.mrb[0].mxu0
        %819 = vmatprep.mubr.bf16.mxu0 %v522
        %820 = vmatmul.mubr.bf16.gmra.mrb[0].mxu0 %v521
        %v821 = vpop.f32.mrb[0].mxu0
        %v822 = vadd.f32 0.0, %v821
        %v823 = vpop.f32.mrb[0].mxu0
        %v824 = vpop.f32.mrb[0].mxu0
        %v825 = vadd.f32 0.0, %v824
        %v826 = vpop.f32.mrb[0].mxu0
        %827 = vmatprep.mubr.bf16.mxu0 %v524
        %828 = vmatmul.mubr.bf16.gmra.mrb[0].mxu0 %v523
        %v829 = vpop.f32.mrb[0].mxu0
        %v830 = vadd.f32 0.0, %v829
        %v831 = vpop.f32.mrb[0].mxu0
        %v832 = vpop.f32.mrb[0].mxu0
        %v833 = vadd.f32 0.0, %v832
        %v834 = vpop.f32.mrb[0].mxu0
        %835 = vmatprep.mubr.bf16.mxu0 %v526
        %836 = vmatmul.mubr.bf16.gmra.mrb[0].mxu0 %v525
        %v837 = vpop.f32.mrb[0].mxu0
        %v838 = vadd.f32 0.0, %v837
        %v839 = vpop.f32.mrb[0].mxu0
        %v840 = vpop.f32.mrb[0].mxu0
        %v841 = vadd.f32 0.0, %v840
        %v842 = vpop.f32.mrb[0].mxu0
        %843 = vmatprep.mubr.bf16.mxu0 %v528
        %844 = vmatmul.mubr.bf16.gmra.mrb[0].mxu0 %v527
        %v845 = vpop.f32.mrb[0].mxu0
        %v846 = vadd.f32 0.0, %v845
        %v847 = vpop.f32.mrb[0].mxu0
        %v848 = vpop.f32.mrb[0].mxu0
        %v849 = vadd.f32 0.0, %v848
        %v850 = vpop.f32.mrb[0].mxu0
        %851 = vmatprep.mubr.bf16.mxu0 %v530
        %852 = vmatmul.mubr.bf16.gmra.mrb[0].mxu0 %v529
        %v853 = vpop.f32.mrb[0].mxu0
        %v854 = vadd.f32 0.0, %v853
        %v855 = vpop.f32.mrb[0].mxu0
        %v856 = vpop.f32.mrb[0].mxu0
        %v857 = vadd.f32 0.0, %v856
        %v858 = vpop.f32.mrb[0].mxu0
        %859 = vmatprep.mubr.bf16.mxu0 %v532
        %860 = vmatmul.mubr.bf16.gmra.mrb[0].mxu0 %v531
        %v861 = vpop.f32.mrb[0].mxu0
        %v862 = vadd.f32 0.0, %v861
        %v863 = vpop.f32.mrb[0].mxu0
        %v864 = vpop.f32.mrb[0].mxu0
        %v865 = vadd.f32 0.0, %v864
        %v866 = vpop.f32.mrb[0].mxu0
        %867 = vmatprep.mubr.bf16.mxu0 %v534
        %868 = vmatmul.mubr.bf16.gmra.mrb[0].mxu0 %v533
        %v869 = vpop.f32.mrb[0].mxu0
        %v870 = vadd.f32 0.0, %v869
        %v871 = vpop.f32.mrb[0].mxu0
        %v872 = vpop.f32.mrb[0].mxu0
        %v873 = vadd.f32 0.0, %v872
        %v874 = vpop.f32.mrb[0].mxu0
        %875 = vmatprep.mubr.bf16.mxu0 %v536
        %876 = vmatmul.mubr.bf16.gmra.mrb[0].mxu0 %v535
        %v877 = vpop.f32.mrb[0].mxu0
        %v878 = vadd.f32 0.0, %v877
        %v879 = vpop.f32.mrb[0].mxu0
        %v880 = vpop.f32.mrb[0].mxu0
        %v881 = vadd.f32 0.0, %v880
        %v882 = vpop.f32.mrb[0].mxu0
        %883 = vmatprep.mubr.bf16.mxu0 %v538
        %884 = vmatmul.mubr.bf16.gmra.mrb[0].mxu0 %v537
        %v885 = vpop.f32.mrb[0].mxu0
        %v886 = vadd.f32 0.0, %v885
        %v887 = vpop.f32.mrb[0].mxu0
        %v888 = vpop.f32.mrb[0].mxu0
        %v889 = vadd.f32 0.0, %v888
        %v890 = vpop.f32.mrb[0].mxu0
        %891 = vmatprep.mubr.bf16.mxu0 %v540
        %892 = vmatmul.mubr.bf16.gmra.mrb[0].mxu0 %v539
        %v893 = vpop.f32.mrb[0].mxu0
        %v894 = vadd.f32 0.0, %v893
        %v895 = vpop.f32.mrb[0].mxu0
        %v896 = vpop.f32.mrb[0].mxu0
        %v897 = vadd.f32 0.0, %v896
        %v898 = vpop.f32.mrb[0].mxu0
        %899 = vmatprep.mubr.bf16.mxu0 %v542
        %900 = vmatmul.mubr.bf16.gmra.mrb[0].mxu0 %v541
        %v901 = vpop.f32.mrb[0].mxu0
        %v902 = vadd.f32 0.0, %v901
        %v903 = vpop.f32.mrb[0].mxu0
        %v904 = vpop.f32.mrb[0].mxu0
        %v905 = vadd.f32 0.0, %v904
        %v906 = vpop.f32.mrb[0].mxu0
        %907 = vmatprep.mubr.bf16.mxu0 %v544
        %908 = vmatmul.mubr.bf16.gmra.mrb[0].mxu0 %v543
        %v909 = vpop.f32.mrb[0].mxu0
        %v910 = vadd.f32 0.0, %v909
        %v911 = vpop.f32.mrb[0].mxu0
        %v912 = vpop.f32.mrb[0].mxu0
        %v913 = vadd.f32 0.0, %v912
        %v914 = vpop.f32.mrb[0].mxu0
        %915 = vmatprep.mubr.bf16.mxu0 %v546
        %916 = vmatmul.mubr.bf16.gmra.mrb[0].mxu0 %v545
        %v917 = vpop.f32.mrb[0].mxu0
        %v918 = vadd.f32 0.0, %v917
        %v919 = vpop.f32.mrb[0].mxu0
        %v920 = vpop.f32.mrb[0].mxu0
        %v921 = vadd.f32 0.0, %v920
        %v922 = vpop.f32.mrb[0].mxu0
        %923 = vmatprep.mubr.bf16.mxu0 %v548
        %924 = vmatmul.mubr.bf16.gmra.mrb[0].mxu0 %v547
        %v925 = vpop.f32.mrb[0].mxu0
        %v926 = vadd.f32 0.0, %v925
        %v927 = vpop.f32.mrb[0].mxu0
        %v928 = vpop.f32.mrb[0].mxu0
        %v929 = vadd.f32 0.0, %v928
        %v930 = vpop.f32.mrb[0].mxu0
        %931 = vmatprep.mubr.bf16.mxu0 %v550
        %932 = vmatmul.mubr.bf16.gmra.mrb[0].mxu0 %v549
        %v933 = vpop.f32.mrb[0].mxu0
        %v934 = vadd.f32 0.0, %v933
        %v935 = vpop.f32.mrb[0].mxu0
        %v936 = vpop.f32.mrb[0].mxu0
        %v937 = vadd.f32 0.0, %v936
        %v938 = vpop.f32.mrb[0].mxu0
        %939 = vmatprep.mubr.bf16.mxu0 %v552
        %940 = vmatmul.mubr.bf16.gmra.mrb[0].mxu0 %v551
        %v941 = vpop.f32.mrb[0].mxu0
        %v942 = vadd.f32 0.0, %v941
        %v943 = vpop.f32.mrb[0].mxu0
        %v944 = vpop.f32.mrb[0].mxu0
        %v945 = vadd.f32 0.0, %v944
        %v946 = vpop.f32.mrb[0].mxu0
        %947 = vmatprep.mubr.bf16.mxu0 %v554
        %948 = vmatmul.mubr.bf16.gmra.mrb[0].mxu0 %v553
        %v949 = vpop.f32.mrb[0].mxu0
        %v950 = vadd.f32 0.0, %v949
        %v951 = vpop.f32.mrb[0].mxu0
        %v952 = vpop.f32.mrb[0].mxu0
        %v953 = vadd.f32 0.0, %v952
        %v954 = vpop.f32.mrb[0].mxu0
        %955 = vmatprep.mubr.bf16.mxu0 %v556
        %956 = vmatmul.mubr.bf16.gmra.mrb[0].mxu0 %v555
        %v957 = vpop.f32.mrb[0].mxu0
        %v958 = vadd.f32 0.0, %v957
        %v959 = vpop.f32.mrb[0].mxu0
        %v960 = vpop.f32.mrb[0].mxu0
        %v961 = vadd.f32 0.0, %v960
        %v962 = vpop.f32.mrb[0].mxu0
        %963 = vmatprep.mubr.bf16.mxu0 %v558
        %964 = vmatmul.mubr.bf16.gmra.mrb[0].mxu0 %v557
        %v965 = vpop.f32.mrb[0].mxu0
        %v966 = vadd.f32 0.0, %v965
        %v967 = vpop.f32.mrb[0].mxu0
        %v968 = vpop.f32.mrb[0].mxu0
        %v969 = vadd.f32 0.0, %v968
        %v970 = vpop.f32.mrb[0].mxu0
        %971 = vmatprep.mubr.bf16.mxu0 %v560
        %972 = vmatmul.mubr.bf16.gmra.mrb[0].mxu0 %v559
        %v973 = vpop.f32.mrb[0].mxu0
        %v974 = vadd.f32 0.0, %v973
        %v975 = vpop.f32.mrb[0].mxu0
        %v976 = vpop.f32.mrb[0].mxu0
        %v977 = vadd.f32 0.0, %v976
        %v978 = vpop.f32.mrb[0].mxu0
        %979 = vmatprep.mubr.bf16.mxu0 %v562
        %980 = vmatmul.mubr.bf16.gmra.mrb[0].mxu0 %v561
        %v981 = vpop.f32.mrb[0].mxu0
        %v982 = vadd.f32 0.0, %v981
        %v983 = vpop.f32.mrb[0].mxu0
        %v984 = vpop.f32.mrb[0].mxu0
        %v985 = vadd.f32 0.0, %v984
        %v986 = vpop.f32.mrb[0].mxu0
        %987 = vmatprep.mubr.bf16.mxu0 %v564
        %988 = vmatmul.mubr.bf16.gmra.mrb[0].mxu0 %v563
        %v989 = vpop.f32.mrb[0].mxu0
        %v990 = vadd.f32 0.0, %v989
        %v991 = vpop.f32.mrb[0].mxu0
        %v992 = vpop.f32.mrb[0].mxu0
        %v993 = vadd.f32 0.0, %v992
        %v994 = vpop.f32.mrb[0].mxu0
        %995 = vmatprep.mubr.bf16.mxu0 %v566
        %996 = vmatmul.mubr.bf16.gmra.mrb[0].mxu0 %v565
        %v997 = vpop.f32.mrb[0].mxu0
        %v998 = vadd.f32 0.0, %v997
        %v999 = vpop.f32.mrb[0].mxu0
        %v1000 = vpop.f32.mrb[0].mxu0
        %v1001 = vadd.f32 0.0, %v1000
        %v1002 = vpop.f32.mrb[0].mxu0
        %1003 = vmatprep.mubr.bf16.mxu0 %v568
        %1004 = vmatmul.mubr.bf16.gmra.mrb[0].mxu0 %v567
        %v1005 = vpop.f32.mrb[0].mxu0
        %v1006 = vadd.f32 0.0, %v1005
        %v1007 = vpop.f32.mrb[0].mxu0
        %v1008 = vpop.f32.mrb[0].mxu0
        %v1009 = vadd.f32 0.0, %v1008
        %v1010 = vpop.f32.mrb[0].mxu0
        %1011 = vmatprep.mubr.bf16.mxu0 %v570
        %1012 = vmatmul.mubr.bf16.gmra.mrb[0].mxu0 %v569
        %v1013 = vpop.f32.mrb[0].mxu0
        %v1014 = vadd.f32 0.0, %v1013
        %v1015 = vpop.f32.mrb[0].mxu0
        %v1016 = vpop.f32.mrb[0].mxu0
        %v1017 = vadd.f32 0.0, %v1016
        %v1018 = vpop.f32.mrb[0].mxu0
        %1019 = vdwg.mxu0
        %1020 = vst [vmem:[%s208] sm:$0xff] %v766
        %1021 = vst [vmem:[%s208 + $0x8] sm:$0xff] %v769
        %1022 = vst [vmem:[%s208 + $0x10] sm:$0xff] %v774
        %1023 = vst [vmem:[%s208 + $0x18] sm:$0xff] %v777
        %1024 = vst [vmem:[%s208 + $0x20] sm:$0xff] %v782
        %1025 = vst [vmem:[%s208 + $0x28] sm:$0xff] %v785
        %1026 = vst [vmem:[%s208 + $0x30] sm:$0xff] %v790
        %1027 = vst [vmem:[%s208 + $0x38] sm:$0xff] %v793
        %1028 = vst [vmem:[%s208 + $0x40] sm:$0xff] %v798
        %1029 = vst [vmem:[%s208 + $0x48] sm:$0xff] %v801
        %1030 = vst [vmem:[%s208 + $0x50] sm:$0xff] %v806
        %1031 = vst [vmem:[%s208 + $0x58] sm:$0xff] %v809
        %1032 = vst [vmem:[%s208 + $0x60] sm:$0xff] %v814
        %1033 = vst [vmem:[%s208 + $0x68] sm:$0xff] %v817
        %1034 = vst [vmem:[%s208 + $0x70] sm:$0xff] %v822
        %1035 = vst [vmem:[%s208 + $0x78] sm:$0xff] %v825
        %1036 = vst [vmem:[%s208 + $0x80] sm:$0xff] %v830
        %1037 = vst [vmem:[%s208 + $0x88] sm:$0xff] %v833
        %1038 = vst [vmem:[%s208 + $0x90] sm:$0xff] %v838
        %1039 = vst [vmem:[%s208 + $0x98] sm:$0xff] %v841
        %1040 = vst [vmem:[%s208 + $0xa0] sm:$0xff] %v846
        %1041 = vst [vmem:[%s208 + $0xa8] sm:$0xff] %v849
        %1042 = vst [vmem:[%s208 + $0xb0] sm:$0xff] %v854
        %1043 = vst [vmem:[%s208 + $0xb8] sm:$0xff] %v857
        %1044 = vst [vmem:[%s208 + $0xc0] sm:$0xff] %v862
        %1045 = vst [vmem:[%s208 + $0xc8] sm:$0xff] %v865
        %1046 = vst [vmem:[%s208 + $0xd0] sm:$0xff] %v870
        %1047 = vst [vmem:[%s208 + $0xd8] sm:$0xff] %v873
        %1048 = vst [vmem:[%s208 + $0xe0] sm:$0xff] %v878
        %1049 = vst [vmem:[%s208 + $0xe8] sm:$0xff] %v881
        %1050 = vst [vmem:[%s208 + $0xf0] sm:$0xff] %v886
        %1051 = vst [vmem:[%s208 + $0xf8] sm:$0xff] %v889
        %1052 = vst [vmem:[%s208 + $0x100] sm:$0xff] %v894
        %1053 = vst [vmem:[%s208 + $0x108] sm:$0xff] %v897
        %1054 = vst [vmem:[%s208 + $0x110] sm:$0xff] %v902
        %1055 = vst [vmem:[%s208 + $0x118] sm:$0xff] %v905
        %1056 = vst [vmem:[%s208 + $0x120] sm:$0xff] %v910
        %1057 = vst [vmem:[%s208 + $0x128] sm:$0xff] %v913
        %1058 = vst [vmem:[%s208 + $0x130] sm:$0xff] %v918
        %1059 = vst [vmem:[%s208 + $0x138] sm:$0xff] %v921
        %1060 = vst [vmem:[%s208 + $0x140] sm:$0xff] %v926
        %1061 = vst [vmem:[%s208 + $0x148] sm:$0xff] %v929
        %1062 = vst [vmem:[%s208 + $0x150] sm:$0xff] %v934
        %1063 = vst [vmem:[%s208 + $0x158] sm:$0xff] %v937
        %1064 = vst [vmem:[%s208 + $0x160] sm:$0xff] %v942
        %1065 = vst [vmem:[%s208 + $0x168] sm:$0xff] %v945
        %1066 = vst [vmem:[%s208 + $0x170] sm:$0xff] %v950
        %1067 = vst [vmem:[%s208 + $0x178] sm:$0xff] %v953
        %1068 = vst [vmem:[%s208 + $0x180] sm:$0xff] %v958
        %1069 = vst [vmem:[%s208 + $0x188] sm:$0xff] %v961
        %1070 = vst [vmem:[%s208 + $0x190] sm:$0xff] %v966
        %1071 = vst [vmem:[%s208 + $0x198] sm:$0xff] %v969
        %1072 = vst [vmem:[%s208 + $0x1a0] sm:$0xff] %v974
        %1073 = vst [vmem:[%s208 + $0x1a8] sm:$0xff] %v977
        %1074 = vst [vmem:[%s208 + $0x1b0] sm:$0xff] %v982
        %1075 = vst [vmem:[%s208 + $0x1b8] sm:$0xff] %v985
        %1076 = vst [vmem:[%s208 + $0x1c0] sm:$0xff] %v990
        %1077 = vst [vmem:[%s208 + $0x1c8] sm:$0xff] %v993
        %1078 = vst [vmem:[%s208 + $0x1d0] sm:$0xff] %v998
        %1079 = vst [vmem:[%s208 + $0x1d8] sm:$0xff] %v1001
        %1080 = vst [vmem:[%s208 + $0x1e0] sm:$0xff] %v1006
        %1081 = vst [vmem:[%s208 + $0x1e8] sm:$0xff] %v1009
        %1082 = vst [vmem:[%s208 + $0x1f0] sm:$0xff] %v1014
        %1083 = vst [vmem:[%s208 + $0x1f8] sm:$0xff] %v1017
        %v1084 = vadd.f32 %v766, %v769
        %v1085 = vadd.f32 %v1084, %v774
        %v1086 = vadd.f32 %v1085, %v777
        %v1087 = vadd.f32 %v1086, %v782
        %v1088 = vadd.f32 %v1087, %v785
        %v1089 = vadd.f32 %v1088, %v790
        %v1090 = vadd.f32 %v1089, %v793
        %v1091 = vadd.f32 %v1090, %v798
        %v1092 = vadd.f32 %v1091, %v801
        %v1093 = vadd.f32 %v1092, %v806
        %v1094 = vadd.f32 %v1093, %v809
        %v1095 = vadd.f32 %v1094, %v814
        %v1096 = vadd.f32 %v1095, %v817
        %v1097 = vadd.f32 %v1096, %v822
        %v1098 = vadd.f32 %v1097, %v825
        %v1099 = vadd.f32 %v1098, %v830
        %v1100 = vadd.f32 %v1099, %v833
        %v1101 = vadd.f32 %v1100, %v838
        %v1102 = vadd.f32 %v1101, %v841
        %v1103 = vadd.f32 %v1102, %v846
        %v1104 = vadd.f32 %v1103, %v849
        %v1105 = vadd.f32 %v1104, %v854
        %v1106 = vadd.f32 %v1105, %v857
        %v1107 = vadd.f32 %v1106, %v862
        %v1108 = vadd.f32 %v1107, %v865
        %v1109 = vadd.f32 %v1108, %v870
        %v1110 = vadd.f32 %v1109, %v873
        %v1111 = vadd.f32 %v1110, %v878
        %v1112 = vadd.f32 %v1111, %v881
        %v1113 = vadd.f32 %v1112, %v886
        %v1114 = vadd.f32 %v1113, %v889
        %v1115 = vadd.f32 %v1114, %v894
        %v1116 = vadd.f32 %v1115, %v897
        %v1117 = vadd.f32 %v1116, %v902
        %v1118 = vadd.f32 %v1117, %v905
        %v1119 = vadd.f32 %v1118, %v910
        %v1120 = vadd.f32 %v1119, %v913
        %v1121 = vadd.f32 %v1120, %v918
        %v1122 = vadd.f32 %v1121, %v921
        %v1123 = vadd.f32 %v1122, %v926
        %v1124 = vadd.f32 %v1123, %v929
        %v1125 = vadd.f32 %v1124, %v934
        %v1126 = vadd.f32 %v1125, %v937
        %v1127 = vadd.f32 %v1126, %v942
        %v1128 = vadd.f32 %v1127, %v945
        %v1129 = vadd.f32 %v1128, %v950
        %v1130 = vadd.f32 %v1129, %v953
        %v1131 = vadd.f32 %v1130, %v958
        %v1132 = vadd.f32 %v1131, %v961
        %v1133 = vadd.f32 %v1132, %v966
        %v1134 = vadd.f32 %v1133, %v969
        %v1135 = vadd.f32 %v1134, %v974
        %v1136 = vadd.f32 %v1135, %v977
        %v1137 = vadd.f32 %v1136, %v982
        %v1138 = vadd.f32 %v1137, %v985
        %v1139 = vadd.f32 %v1138, %v990
        %v1140 = vadd.f32 %v1139, %v993
        %v1141 = vadd.f32 %v1140, %v998
        %v1142 = vadd.f32 %v1141, %v1001
        %v1143 = vadd.f32 %v1142, %v1006
        %v1144 = vadd.f32 %v1143, %v1009
        %v1145 = vadd.f32 %v1144, %v1014
        %v1146 = vadd.f32 %v1145, %v1017
        %v1147 = vrot.slane %v1146, 4
        %v1148 = vadd.f32 %v1146, %v1147
        %v1149 = vrot.slane %v1148, 2
        %v1150 = vadd.f32 %v1148, %v1149
        %v1151 = vrot.slane %v1150, 1
        %v1152 = vadd.f32 %v1150, %v1151
        %v1153 = vmul.f32 %v766, %v766
        %v1154 = vmul.f32 %v769, %v769
        %v1155 = vmul.f32 %v774, %v774
        %v1156 = vmul.f32 %v777, %v777
        %v1157 = vmul.f32 %v782, %v782
        %v1158 = vmul.f32 %v785, %v785
        %v1159 = vmul.f32 %v790, %v790
        %v1160 = vmul.f32 %v793, %v793
        %v1161 = vmul.f32 %v798, %v798
        %v1162 = vmul.f32 %v801, %v801
        %v1163 = vmul.f32 %v806, %v806
        %v1164 = vmul.f32 %v809, %v809
        %v1165 = vmul.f32 %v814, %v814
        %v1166 = vmul.f32 %v817, %v817
        %v1167 = vmul.f32 %v822, %v822
        %v1168 = vmul.f32 %v825, %v825
        %v1169 = vmul.f32 %v830, %v830
        %v1170 = vmul.f32 %v833, %v833
        %v1171 = vmul.f32 %v838, %v838
        %v1172 = vmul.f32 %v841, %v841
        %v1173 = vmul.f32 %v846, %v846
        %v1174 = vmul.f32 %v849, %v849
        %v1175 = vmul.f32 %v854, %v854
        %v1176 = vmul.f32 %v857, %v857
        %v1177 = vmul.f32 %v862, %v862
        %v1178 = vmul.f32 %v865, %v865
        %v1179 = vmul.f32 %v870, %v870
        %v1180 = vmul.f32 %v873, %v873
        %v1181 = vmul.f32 %v878, %v878
        %v1182 = vmul.f32 %v881, %v881
        %v1183 = vmul.f32 %v886, %v886
        %v1184 = vmul.f32 %v889, %v889
        %v1185 = vmul.f32 %v894, %v894
        %v1186 = vmul.f32 %v897, %v897
        %v1187 = vmul.f32 %v902, %v902
        %v1188 = vmul.f32 %v905, %v905
        %v1189 = vmul.f32 %v910, %v910
        %v1190 = vmul.f32 %v913, %v913
        %v1191 = vmul.f32 %v918, %v918
        %v1192 = vmul.f32 %v921, %v921
        %v1193 = vmul.f32 %v926, %v926
        %v1194 = vmul.f32 %v929, %v929
        %v1195 = vmul.f32 %v934, %v934
        %v1196 = vmul.f32 %v937, %v937
        %v1197 = vmul.f32 %v942, %v942
        %v1198 = vmul.f32 %v945, %v945
        %v1199 = vmul.f32 %v950, %v950
        %v1200 = vmul.f32 %v953, %v953
        %v1201 = vmul.f32 %v958, %v958
        %v1202 = vmul.f32 %v961, %v961
        %v1203 = vmul.f32 %v966, %v966
        %v1204 = vmul.f32 %v969, %v969
        %v1205 = vmul.f32 %v974, %v974
        %v1206 = vmul.f32 %v977, %v977
        %v1207 = vmul.f32 %v982, %v982
        %v1208 = vmul.f32 %v985, %v985
        %v1209 = vmul.f32 %v990, %v990
        %v1210 = vmul.f32 %v993, %v993
        %v1211 = vmul.f32 %v998, %v998
        %v1212 = vmul.f32 %v1001, %v1001
        %v1213 = vmul.f32 %v1006, %v1006
        %v1214 = vmul.f32 %v1009, %v1009
        %v1215 = vmul.f32 %v1014, %v1014
        %v1216 = vmul.f32 %v1017, %v1017
        %v1217 = vadd.f32 %v1153, %v1154
        %v1218 = vadd.f32 %v1217, %v1155
        %v1219 = vadd.f32 %v1218, %v1156
        %v1220 = vadd.f32 %v1219, %v1157
        %v1221 = vadd.f32 %v1220, %v1158
        %v1222 = vadd.f32 %v1221, %v1159
        %v1223 = vadd.f32 %v1222, %v1160
        %v1224 = vadd.f32 %v1223, %v1161
        %v1225 = vadd.f32 %v1224, %v1162
        %v1226 = vadd.f32 %v1225, %v1163
        %v1227 = vadd.f32 %v1226, %v1164
        %v1228 = vadd.f32 %v1227, %v1165
        %v1229 = vadd.f32 %v1228, %v1166
        %v1230 = vadd.f32 %v1229, %v1167
        %v1231 = vadd.f32 %v1230, %v1168
        %v1232 = vadd.f32 %v1231, %v1169
        %v1233 = vadd.f32 %v1232, %v1170
        %v1234 = vadd.f32 %v1233, %v1171
        %v1235 = vadd.f32 %v1234, %v1172
        %v1236 = vadd.f32 %v1235, %v1173
        %v1237 = vadd.f32 %v1236, %v1174
        %v1238 = vadd.f32 %v1237, %v1175
        %v1239 = vadd.f32 %v1238, %v1176
        %v1240 = vadd.f32 %v1239, %v1177
        %v1241 = vadd.f32 %v1240, %v1178
        %v1242 = vadd.f32 %v1241, %v1179
        %v1243 = vadd.f32 %v1242, %v1180
        %v1244 = vadd.f32 %v1243, %v1181
        %v1245 = vadd.f32 %v1244, %v1182
        %v1246 = vadd.f32 %v1245, %v1183
        %v1247 = vadd.f32 %v1246, %v1184
        %v1248 = vadd.f32 %v1247, %v1185
        %v1249 = vadd.f32 %v1248, %v1186
        %v1250 = vadd.f32 %v1249, %v1187
        %v1251 = vadd.f32 %v1250, %v1188
        %v1252 = vadd.f32 %v1251, %v1189
        %v1253 = vadd.f32 %v1252, %v1190
        %v1254 = vadd.f32 %v1253, %v1191
        %v1255 = vadd.f32 %v1254, %v1192
        %v1256 = vadd.f32 %v1255, %v1193
        %v1257 = vadd.f32 %v1256, %v1194
        %v1258 = vadd.f32 %v1257, %v1195
        %v1259 = vadd.f32 %v1258, %v1196
        %v1260 = vadd.f32 %v1259, %v1197
        %v1261 = vadd.f32 %v1260, %v1198
        %v1262 = vadd.f32 %v1261, %v1199
        %v1263 = vadd.f32 %v1262, %v1200
        %v1264 = vadd.f32 %v1263, %v1201
        %v1265 = vadd.f32 %v1264, %v1202
        %v1266 = vadd.f32 %v1265, %v1203
        %v1267 = vadd.f32 %v1266, %v1204
        %v1268 = vadd.f32 %v1267, %v1205
        %v1269 = vadd.f32 %v1268, %v1206
        %v1270 = vadd.f32 %v1269, %v1207
        %v1271 = vadd.f32 %v1270, %v1208
        %v1272 = vadd.f32 %v1271, %v1209
        %v1273 = vadd.f32 %v1272, %v1210
        %v1274 = vadd.f32 %v1273, %v1211
        %v1275 = vadd.f32 %v1274, %v1212
        %v1276 = vadd.f32 %v1275, %v1213
        %v1277 = vadd.f32 %v1276, %v1214
        %v1278 = vadd.f32 %v1277, %v1215
        %v1279 = vadd.f32 %v1278, %v1216
        %v1280 = vrot.slane %v1279, 4
        %v1281 = vadd.f32 %v1279, %v1280
        %v1282 = vrot.slane %v1281, 2
        %v1283 = vadd.f32 %v1281, %v1282
        %v1284 = vrot.slane %v1283, 1
        %v1285 = vadd.f32 %v1283, %v1284
        %v1286 = vlaneseq
        %v1287 = vshrl.u32 %v1286, 7
        %vm1288 = vcmp.eq.s32.totalorder %v1287, 0
        %vm1289 = vcmp.eq.s32.totalorder %v1287, 1
        %v1290 = vsel %vm1289, %v1285, 0.0
        %v1291 = vsel %vm1288, %v1152, %v1290
        %1292 = vst [vmem:[%s215] sm:$0xff] %v1291
        %s1293 = sand.u32 %s80, 1
        %s1294 = scalar_lea.sflag [#allocation4], %s1293
        %s1295 = sand.u32 %s80, 1
        %s1296 = smul.addr %s1295, 512
        %s1297 = scalar_lea.vmem [#allocation7], %s1296
        %s1298 = sand.u32 %s106, 1
        %s1299 = scalar_lea.sflag [#allocation9], %s1298
        %s1300 = sand.u32 %s106, 1
        %s1301 = smul.addr %s1300, 8
        %s1302 = scalar_lea.vmem [#allocation8], %s1301
        // Predicated region
        $region37: #{tpu_custom_call.1} parent=27 // pred_check
          %p1303 = pneg %p90
        $region38: #{tpu_custom_call.1} parent=27 // pred_check_branch
          %1305 = sbr.rel (%p1303) target = $region40
        $region39: #{tpu_custom_call.1} parent=27 // pred_region
          %s1306 = smul.u32 64, %s25
          %s1308 = ssub.s32 8192, 8192
          %1309 = vsyncadd %s1294, %s1308
          %s1310 = smul.addr %s1306, 128
          %s1311 = scalar_lea.hbm %s2, %s1310
          %s1312 = sshll.u32 %s1297, 4
          %s1313 = int_to_ptr.vmem [resolvable:$true] %s1312
          %1318 = dma.vmem_to_hbm [thread:$0]  %s1313, 8192, %s1311, %s1294, 128, 128, 8
        $region40: #{tpu_custom_call.1} parent=27 // pred_fallthru
          _
        // Predicated region
        $region41: #{tpu_custom_call.1} parent=27 // pred_check
          %p1319 = pneg %p116
        $region42: #{tpu_custom_call.1} parent=27 // pred_check_branch
          %1321 = sbr.rel (%p1319) target = $region44
        $region43: #{tpu_custom_call.1} parent=27 // pred_region
          %s1323 = ssub.s32 128, 128
          %1324 = vsyncadd %s1299, %s1323
          %s1325 = smul.addr %s25, 128
          %s1326 = scalar_lea.hbm %s3, %s1325
          %s1328 = sshll.u32 %s1302, 4
          %s1329 = int_to_ptr.vmem [resolvable:$true] %s1328
          %1331 = dma.vmem_to_hbm [thread:$0]  %s1329, 128, %s1326, %s1299
        $region44: #{tpu_custom_call.1} parent=27 // pred_fallthru
          _
      $region28: #{tpu_custom_call.1} parent=5 // pred_fallthru
        _
      %p1332 = scmp.le.s32.totalorder 2, %s20
      // Predicated region
      $region45: #{tpu_custom_call.1} parent=5 // pred_check
        %p1333 = pneg %p1332
      $region46: #{tpu_custom_call.1} parent=5 // pred_check_branch
        %1335 = sbr.rel (%p1333) target = $region48
      $region47: #{tpu_custom_call.1} parent=5 // pred_region
        %s1336 = ssub.s32 %s20, 2
        // Predicated region
        $region49: #{tpu_custom_call.1} parent=47 // pred_check
          %p1337 = pneg %p96
        $region50: #{tpu_custom_call.1} parent=47 // pred_check_branch
          %1339 = sbr.rel (%p1337) target = $region52
        $region51: #{tpu_custom_call.1} parent=47 // pred_region
          %s1340 = sand.u32 %s81, 1
          %s1341 = scalar_lea.sflag [#allocation4], %s1340
          %s1342 = sand.u32 %s81, 1
          %s1343 = smul.addr %s1342, 512
          %s1344 = scalar_lea.vmem [#allocation7], %s1343
          %1345 = dma.done %s1341, 8192
        $region52: #{tpu_custom_call.1} parent=47 // pred_fallthru
          _
        // Predicated region
        $region53: #{tpu_custom_call.1} parent=47 // pred_check
          %p1346 = pneg %p122
        $region54: #{tpu_custom_call.1} parent=47 // pred_check_branch
          %1348 = sbr.rel (%p1346) target = $region56
        $region55: #{tpu_custom_call.1} parent=47 // pred_region
          %s1349 = sand.u32 %s107, 1
          %s1350 = scalar_lea.sflag [#allocation9], %s1349
          %s1351 = sand.u32 %s107, 1
          %s1352 = smul.addr %s1351, 8
          %s1353 = scalar_lea.vmem [#allocation8], %s1352
          %1354 = dma.done %s1350, 128
        $region56: #{tpu_custom_call.1} parent=47 // pred_fallthru
          _
      $region48: #{tpu_custom_call.1} parent=5 // pred_fallthru
        _
    $region6: #{tpu_custom_call.1} parent=1 // loop_footer
      %s24 = sadd.s32 1, %s20
    $region7: #{tpu_custom_call.1} parent=1 // loop_footer_branch
      %19 = sbr.rel target = $region3
    $region8: #{tpu_custom_call.1} parent=1 // loop_exit
      _
    %1355 = vsyncpa [#allocation3], 1
    %s1356 = scalar_lea.sflag [#allocation3], 1
    %1357 = vsyncpa %s1356, 1
    %1358 = vsyncpa [#allocation6], 1
    %1359 = vsyncpa [#allocation4], 1
    %s1360 = scalar_lea.sflag [#allocation4], 1
    %1361 = vsyncpa %s1360, 1
    %1362 = vsyncpa [#allocation9], 1
    %s1363 = scalar_lea.sflag [#allocation9], 1
    %1364 = vsyncpa %s1363, 1

</llo_original>
